<compile_context>
chip_gen: v5e
topology: v5e:2x2
jax: 0.10.0
libtpu: 0.0.40
codegen_flags: <defaults>
</compile_context>

<pallas_src>
import functools

import jax
import jax.numpy as jnp
from jax.experimental import pallas as pl
from jax.experimental.pallas import tpu as pltpu

LANE = 128
SUBLANE = 8
MAX_TB = 2048  # batch tile ceiling (multiple of 8), ~1.5 MiB HBM / step


def _round_up(n, m):
    return ((n + m - 1) // m) * m


def _pad2(a, rows, cols):
    return jnp.pad(a, ((0, rows - a.shape[0]), (0, cols - a.shape[1])))


def _mlp_kernel(x_ref, w_ref, b_ref, o_ref):
    # Hot path: 3 MXU matmuls (bf16 operands, f32 accumulation) + bias + ReLU.
    # h1/h2 live in vregs/VMEM only and never touch HBM.
    in_dim_pad = x_ref.shape[1]
    x = x_ref[...].astype(jnp.bfloat16)              # bf16 cast rides the VPU
    w1 = w_ref[0][:in_dim_pad, :]                    # static, sublane-aligned slice
    h1 = jnp.dot(x, w1, preferred_element_type=jnp.float32) + b_ref[0]
    h1 = jnp.maximum(h1, 0.0).astype(jnp.bfloat16)
    h2 = jnp.dot(h1, w_ref[1], preferred_element_type=jnp.float32) + b_ref[1]
    h2 = jnp.maximum(h2, 0.0).astype(jnp.bfloat16)
    out = jnp.dot(h2, w_ref[2], preferred_element_type=jnp.float32) + b_ref[2]
    o_ref[...] = out.astype(o_ref.dtype)             # bf16 store: half the writeback


def pack_params(w1, b1, w2, b2, w3, b3):
    """Pad every layer to K x K / 1 x K and pack into one bf16 weight buffer
    and one f32 bias buffer.  Call ONCE at parameter-init time."""
    in_dim, hid = w1.shape
    out_dim = w3.shape[1]
    K = max(_round_up(in_dim, LANE), _round_up(hid, LANE), _round_up(out_dim, LANE))
    w_pack = jnp.stack(
        [_pad2(w1, K, K), _pad2(w2, K, K), _pad2(w3, K, K)]
    ).astype(jnp.bfloat16)
    b_pack = jnp.stack(
        [_pad2(b1, 1, K), _pad2(b2, 1, K), _pad2(b3, 1, K)]
    ).astype(jnp.float32)
    return w_pack, b_pack


@functools.partial(jax.jit, static_argnames=("out_dim",))
def mlp_forward(x, w_pack, b_pack, *, out_dim):
    B, in_dim = x.shape
    K = w_pack.shape[-1]

    # Round in_dim up to a sublane multiple only (cheap); no 128-lane pad.
    in_dim_pad = _round_up(in_dim, SUBLANE)

    # Big batch tiles to amortize per-step overhead; shrink for small B.
    TB = MAX_TB if B > MAX_TB else _round_up(max(B, SUBLANE), SUBLANE)
    B_pad = _round_up(B, TB)

    x_in = x
    if (B_pad, in_dim_pad) != (B, in_dim):
        x_in = jnp.pad(x, ((0, B_pad - B), (0, in_dim_pad - in_dim)))

    out_pad = pl.pallas_call(
        _mlp_kernel,
        out_shape=jax.ShapeDtypeStruct((B_pad, K), jnp.bfloat16),
        grid=(B_pad // TB,),
        in_specs=[
            pl.BlockSpec((TB, in_dim_pad), lambda i: (i, 0)),  # x: streamed raw f32
            pl.BlockSpec((3, K, K), lambda i: (0, 0, 0)),      # weights: VMEM resident
            pl.BlockSpec((3, 1, K), lambda i: (0, 0, 0)),      # biases: VMEM resident
        ],
        out_specs=pl.BlockSpec((TB, K), lambda i: (i, 0)),
        compiler_params=pltpu.CompilerParams(
            dimension_semantics=("parallel",)
        ),
    )(x_in, w_pack, b_pack)

    # Padded batch rows / lanes are sliced away; cast the tiny result to f32.
    return out_pad[:B, :out_dim].astype(jnp.float32)


def init_params(key, in_dim, out_dim, hidden=128):
    # PyTorch nn.Linear-style uniform(-1/sqrt(fan_in), 1/sqrt(fan_in)).
    # Weights stored as (fan_in, fan_out): y = x @ W + b == Linear(x).
    ks = jax.random.split(key, 6)

    def lin(kw, kb, fan_in, fan_out):
        bound = 1.0 / jnp.sqrt(jnp.float32(fan_in))
        w = jax.random.uniform(kw, (fan_in, fan_out), jnp.float32, -bound, bound)
        b = jax.random.uniform(kb, (1, fan_out), jnp.float32, -bound, bound)
        return w, b

    w1, b1 = lin(ks[0], ks[1], in_dim, hidden)
    w2, b2 = lin(ks[2], ks[3], hidden, hidden)
    w3, b3 = lin(ks[4], ks[5], hidden, out_dim)
    return w1, b1, w2, b2, w3, b3


def reference_forward(x, w1, b1, w2, b2, w3, b3):
    # Mirrors the kernel's mixed precision: bf16 operands, f32 accumulation.
    rnd = lambda a: a.astype(jnp.bfloat16).astype(jnp.float32)
    dot = functools.partial(jnp.dot, precision=jax.lax.Precision.HIGHEST)
    h1 = jnp.maximum(dot(rnd(x), rnd(w1)) + b1, 0.0)
    h2 = jnp.maximum(dot(rnd(h1), rnd(w2)) + b2, 0.0)
    return dot(rnd(h2), rnd(w3)) + b3


if __name__ == "__main__":
    key = jax.random.PRNGKey(0)
    in_dim, out_dim, batch = 16, 4, 8  # e.g. DQN: 16-dim state, 4 actions

    kx, kp = jax.random.split(key)
    x = jax.random.normal(kx, (batch, in_dim), jnp.float32)
    raw_params = init_params(kp, in_dim, out_dim)
    w_pack, b_pack = pack_params(*raw_params)   # packed once, reused every call

    out = jax.block_until_ready(mlp_forward(x, w_pack, b_pack, out_dim=out_dim))
    ref = reference_forward(x, *raw_params)

    assert out.shape == (batch, out_dim)
    assert jnp.allclose(out, ref, atol=1e-2, rtol=1e-2), "mismatch vs JAX reference"

    print("KERNEL_OK")
</pallas_src>

<mosaic_0001>
module attributes {stable_mosaic.version = 11 : i64} {
  func.func @_mlp_kernel(%arg0: i32, %arg1: memref<8x16xf32, #tpu.memory_space<vmem>>, %arg2: memref<3x128x128xbf16, #tpu.memory_space<vmem>>, %arg3: memref<3x1x128xf32, #tpu.memory_space<vmem>>, %arg4: memref<8x128xbf16, #tpu.memory_space<vmem>>) attributes {dimension_semantics = [#tpu.dimension_semantics<parallel>], iteration_bounds = array<i64: 1>, scalar_prefetch = 0 : i64, scratch_operands = 0 : i64, tpu.core_type = #tpu.core_type<tc>, window_params = [{transform_indices = @transform_0, window_bounds = array<i64: 8, 16>}, {pipeline_mode = #tpu.pipeline_mode<synchronous>, transform_indices = @transform_1, window_bounds = array<i64: 3, 128, 128>}, {pipeline_mode = #tpu.pipeline_mode<synchronous>, transform_indices = @transform_2, window_bounds = array<i64: 3, 1, 128>}, {transform_indices = @transform_3, window_bounds = array<i64: 8, 128>}]} {
    %c0 = arith.constant 0 : index
    %c0_0 = arith.constant 0 : index
    %0 = vector.load %arg1[%c0, %c0_0] : memref<8x16xf32, #tpu.memory_space<vmem>>, vector<8x16xf32>
    %1 = arith.truncf %0 : vector<8x16xf32> to vector<8x16xbf16>
    %c0_1 = arith.constant 0 : index
    %c0_2 = arith.constant 0 : index
    %c0_3 = arith.constant 0 : index
    %2 = vector.load %arg2[%c0_1, %c0_2, %c0_3] : memref<3x128x128xbf16, #tpu.memory_space<vmem>>, vector<1x128x128xbf16>
    %3 = vector.shape_cast %2 : vector<1x128x128xbf16> to vector<128x128xbf16>
    %4 = vector.extract_strided_slice %3 {offsets = [0, 0], sizes = [16, 128], strides = [1, 1]} : vector<128x128xbf16> to vector<16x128xbf16>
    %cst = arith.constant dense<0.000000e+00> : vector<8x128xf32>
    %5 = tpu.matmul %1, %4, %cst {dimension_numbers = #tpu.dot_dimension_numbers<[1], [0], [0], [1], [0, 0, 1, 1], [], []>} : vector<8x16xbf16>, vector<16x128xbf16>, vector<8x128xf32> -> vector<8x128xf32>
    %c0_4 = arith.constant 0 : index
    %c0_5 = arith.constant 0 : index
    %c0_6 = arith.constant 0 : index
    %6 = vector.load %arg3[%c0_4, %c0_5, %c0_6] : memref<3x1x128xf32, #tpu.memory_space<vmem>>, vector<1x1x128xf32>
    %7 = vector.shape_cast %6 : vector<1x1x128xf32> to vector<1x128xf32>
    %8 = vector.broadcast %7 : vector<1x128xf32> to vector<8x128xf32>
    %9 = arith.addf %5, %8 : vector<8x128xf32>
    %cst_7 = arith.constant 0.000000e+00 : f32
    %10 = vector.broadcast %cst_7 : f32 to vector<8x128xf32>
    %11 = arith.maximumf %9, %10 : vector<8x128xf32>
    %12 = arith.truncf %11 : vector<8x128xf32> to vector<8x128xbf16>
    %c1 = arith.constant 1 : index
    %c0_8 = arith.constant 0 : index
    %c0_9 = arith.constant 0 : index
    %13 = vector.load %arg2[%c1, %c0_8, %c0_9] : memref<3x128x128xbf16, #tpu.memory_space<vmem>>, vector<1x128x128xbf16>
    %14 = vector.shape_cast %13 : vector<1x128x128xbf16> to vector<128x128xbf16>
    %cst_10 = arith.constant dense<0.000000e+00> : vector<8x128xf32>
    %15 = tpu.matmul %12, %14, %cst_10 {dimension_numbers = #tpu.dot_dimension_numbers<[1], [0], [0], [1], [0, 0, 1, 1], [], []>} : vector<8x128xbf16>, vector<128x128xbf16>, vector<8x128xf32> -> vector<8x128xf32>
    %c1_11 = arith.constant 1 : index
    %c0_12 = arith.constant 0 : index
    %c0_13 = arith.constant 0 : index
    %16 = vector.load %arg3[%c1_11, %c0_12, %c0_13] : memref<3x1x128xf32, #tpu.memory_space<vmem>>, vector<1x1x128xf32>
    %17 = vector.shape_cast %16 : vector<1x1x128xf32> to vector<1x128xf32>
    %18 = vector.broadcast %17 : vector<1x128xf32> to vector<8x128xf32>
    %19 = arith.addf %15, %18 : vector<8x128xf32>
    %cst_14 = arith.constant 0.000000e+00 : f32
    %20 = vector.broadcast %cst_14 : f32 to vector<8x128xf32>
    %21 = arith.maximumf %19, %20 : vector<8x128xf32>
    %22 = arith.truncf %21 : vector<8x128xf32> to vector<8x128xbf16>
    %c2 = arith.constant 2 : index
    %c0_15 = arith.constant 0 : index
    %c0_16 = arith.constant 0 : index
    %23 = vector.load %arg2[%c2, %c0_15, %c0_16] : memref<3x128x128xbf16, #tpu.memory_space<vmem>>, vector<1x128x128xbf16>
    %24 = vector.shape_cast %23 : vector<1x128x128xbf16> to vector<128x128xbf16>
    %cst_17 = arith.constant dense<0.000000e+00> : vector<8x128xf32>
    %25 = tpu.matmul %22, %24, %cst_17 {dimension_numbers = #tpu.dot_dimension_numbers<[1], [0], [0], [1], [0, 0, 1, 1], [], []>} : vector<8x128xbf16>, vector<128x128xbf16>, vector<8x128xf32> -> vector<8x128xf32>
    %c2_18 = arith.constant 2 : index
    %c0_19 = arith.constant 0 : index
    %c0_20 = arith.constant 0 : index
    %26 = vector.load %arg3[%c2_18, %c0_19, %c0_20] : memref<3x1x128xf32, #tpu.memory_space<vmem>>, vector<1x1x128xf32>
    %27 = vector.shape_cast %26 : vector<1x1x128xf32> to vector<1x128xf32>
    %28 = vector.broadcast %27 : vector<1x128xf32> to vector<8x128xf32>
    %29 = arith.addf %25, %28 : vector<8x128xf32>
    %30 = arith.truncf %29 : vector<8x128xf32> to vector<8x128xbf16>
    %c0_21 = arith.constant 0 : index
    %c0_22 = arith.constant 0 : index
    %31 = vector.load %arg4[%c0_21, %c0_22] : memref<8x128xbf16, #tpu.memory_space<vmem>>, vector<8x128xbf16>
    tpu.vector_store %arg4[%c0_21, %c0_22], %30 {strides = array<i32>} : memref<8x128xbf16, #tpu.memory_space<vmem>>, vector<8x128xbf16>,
    return
  }
  func.func @transform_0(%arg0: i32) -> (i32, i32) {
    %c0_i32 = arith.constant 0 : i32
    %c0_i32_0 = arith.constant 0 : i32
    return %arg0, %c0_i32 : i32, i32
  }
  func.func @transform_1(%arg0: i32) -> (i32, i32, i32) {
    %c0_i32 = arith.constant 0 : i32
    %c0_i32_0 = arith.constant 0 : i32
    %c0_i32_1 = arith.constant 0 : i32
    %c0_i32_2 = arith.constant 0 : i32
    return %c0_i32, %c0_i32_0, %c0_i32_1 : i32, i32, i32
  }
  func.func @transform_2(%arg0: i32) -> (i32, i32, i32) {
    %c0_i32 = arith.constant 0 : i32
    %c0_i32_0 = arith.constant 0 : i32
    %c0_i32_1 = arith.constant 0 : i32
    %c0_i32_2 = arith.constant 0 : i32
    return %c0_i32, %c0_i32_0, %c0_i32_1 : i32, i32, i32
  }
  func.func @transform_3(%arg0: i32) -> (i32, i32) {
    %c0_i32 = arith.constant 0 : i32
    %c0_i32_0 = arith.constant 0 : i32
    return %arg0, %c0_i32 : i32, i32
  }
}

</mosaic_0001>

<llo_original>
// kernel: mlp_forward.1
$region0: #{mlp_forward.1}
  #allocation0 [shape = 'u32[]', space=smem, size = 0x4, offset = 0x4, fixed_abs, tag = 'smem constant byte address 0x4 - core index']
  #allocation1 [shape = 'u32[72,128]{1,0:T(1,128)}', space=vmem, size = 0x9000, scoped, tag = 'internal scratch']
  %s0 = inlined_call_operand.hbm [shape: f32[8,16], index: 0, kind: input, shape index: {}]
  %s1 = inlined_call_operand.hbm [shape: bf16[3,128,128], index: 1, kind: input, shape index: {}]
  %s2 = inlined_call_operand.hbm [shape: f32[3,1,128], index: 2, kind: input, shape index: {}]
  %s3 = inlined_call_operand.vmem [shape: bf16[8,128], index: 3, kind: output, shape index: {}]
  %s4 = sld [smem:[#allocation0]]
  $region34: #{mlp_forward.1} parent=0
    _
  %s6 = ssub.s32 1, %s4
  %s7 = scalar_select 0, %s6, %s4
  $region1: #{mlp_forward.1} parent=0
    #allocation2 [shape = 'u8[4096]{0}', space=vmem, size = 0x1000, scoped, tag = 'input window, operand 0, single buffered']
    #allocation3 [shape = 's32[1]{0}', space=sflag, size = 0x4, scoped, tag = 'scoped memory for mlp_forward.1']
    #allocation4 [shape = 'u8[98304]{0}', space=vmem, size = 0x18000, scoped, tag = 'input window, operand 1, single buffered']
    #allocation5 [shape = 's32[1]{0}', space=sflag, size = 0x4, scoped, tag = 'scoped memory for mlp_forward.1']
    #allocation6 [shape = 'u8[1536]{0}', space=vmem, size = 0x800, scoped, tag = 'input window, operand 2, single buffered']
    %8 = vsyncpa [#allocation3], 0
    %9 = vsyncpa [#allocation5], 0
    // Predicated region
    $region2: #{mlp_forward.1} parent=1 // pred_check
      _
    $region3: #{mlp_forward.1} parent=1 // pred_check_branch
      %11 = sbr.rel (0) target = $region5
    $region4: #{mlp_forward.1} parent=1 // pred_region
      %13 = vsyncadd [#allocation3], 0
      %s15 = sshll.u32 %s0, 4
      %s16 = int_to_ptr.hbm [resolvable:$true] %s15
      %s17 = sshll.u32 [#allocation2], 4
      %s18 = int_to_ptr.vmem [resolvable:$true] %s17
      %20 = dma.hbm_to_vmem [thread:$0]  %s16, 128, %s18, [#allocation3]
    $region5: #{mlp_forward.1} parent=1 // pred_fallthru
      _
    // Predicated region
    $region6: #{mlp_forward.1} parent=1 // pred_check
      _
    $region7: #{mlp_forward.1} parent=1 // pred_check_branch
      %22 = sbr.rel (0) target = $region9
    $region8: #{mlp_forward.1} parent=1 // pred_region
      %24 = vsyncadd [#allocation5], 0
      %s25 = sshll.u32 %s1, 4
      %s26 = int_to_ptr.hbm [resolvable:$true] %s25
      %s27 = sshll.u32 [#allocation4], 4
      %s28 = int_to_ptr.vmem [resolvable:$true] %s27
      %33 = dma.hbm_to_vmem [thread:$0]  %s26, 3072, %s28, [#allocation5], 64, 64, 4
    $region9: #{mlp_forward.1} parent=1 // pred_fallthru
      _
    // Predicated region
    $region10: #{mlp_forward.1} parent=1 // pred_check
      _
    $region11: #{mlp_forward.1} parent=1 // pred_check_branch
      %35 = sbr.rel (0) target = $region13
    $region12: #{mlp_forward.1} parent=1 // pred_region
      %37 = vsyncadd [#allocation5], 0
      %s38 = sshll.u32 %s2, 4
      %s39 = int_to_ptr.hbm [resolvable:$true] %s38
      %s40 = sshll.u32 [#allocation6], 4
      %s41 = int_to_ptr.vmem [resolvable:$true] %s40
      %46 = dma.hbm_to_vmem [thread:$0]  %s39, 48, %s41, [#allocation5], 16, 16, 1
    $region13: #{mlp_forward.1} parent=1 // pred_fallthru
      _
    // Predicated region
    $region14: #{mlp_forward.1} parent=1 // pred_check
      _
    $region15: #{mlp_forward.1} parent=1 // pred_check_branch
      %48 = sbr.rel (0) target = $region17
    $region16: #{mlp_forward.1} parent=1 // pred_region
      %50 = dma.done [#allocation3], 128
    $region17: #{mlp_forward.1} parent=1 // pred_fallthru
      _
    // Predicated region
    $region18: #{mlp_forward.1} parent=1 // pred_check
      _
    $region19: #{mlp_forward.1} parent=1 // pred_check_branch
      %52 = sbr.rel (0) target = $region21
    $region20: #{mlp_forward.1} parent=1 // pred_region
      %54 = dma.done [#allocation5], 3072
    $region21: #{mlp_forward.1} parent=1 // pred_fallthru
      _
    // Predicated region
    $region22: #{mlp_forward.1} parent=1 // pred_check
      _
    $region23: #{mlp_forward.1} parent=1 // pred_check_branch
      %56 = sbr.rel (0) target = $region25
    $region24: #{mlp_forward.1} parent=1 // pred_region
      %58 = dma.done [#allocation5], 48
    $region25: #{mlp_forward.1} parent=1 // pred_fallthru
      _
    %v60 = vld [vmem:[#allocation2] sm:$0xff]
    %v61 = vpack.c.bf16 %v60, %v60
    %v62 = vld [vmem:[#allocation4] sm:$0xf]
    %v63 = vld [vmem:[#allocation4 + $0x4] sm:$0xf]
    %v64 = vld [vmem:[#allocation6] sm:$0x1]
    %v66 = vperm.slane %v64, 0
    %v70 = vunpack.c.l.b16 %v62
    %v71 = vunpack.c.l.b16 %v63
    %v72 = vpack.c.b16 %v71, %v70
    %vm74 = vcmask 130048
    %v76 = vsel %vm74, %v61, 0
    %78 = vmatpush.bf16.msra.mxu0 0
    %79 = vmatpush.bf16.msra.mxu0 0
    %80 = vmatpush.bf16.msra.mxu0 0
    %81 = vmatpush.bf16.msra.mxu0 0
    %82 = vmatpush.bf16.msra.mxu0 0
    %83 = vmatpush.bf16.msra.mxu0 0
    %84 = vmatpush.bf16.msra.mxu0 0
    %85 = vmatpush.bf16.msra.mxu0 %v72
    %86 = vmatmul.bf16.gmra.mxu0 %v76
    %v87 = vpop.f32.mrf.mxu0
    %v88 = vadd.f32 %v66, %v87
    %v89 = vpop.f32.mrf.mxu0
    %90 = vdwg.mxu0
    %v91 = vmax.f32 %v88, 0.0
    %v92 = vpack.c.bf16 %v91, %v91
    %s93 = scalar_lea.vmem [#allocation4], 64
    %v94 = vld [vmem:[%s93] sm:$0xf]
    %v95 = vld [vmem:[%s93 + $0x4] sm:$0xf]
    %v96 = vld [vmem:[%s93 + $0x8] sm:$0xf]
    %v97 = vld [vmem:[%s93 + $0xc] sm:$0xf]
    %v98 = vld [vmem:[%s93 + $0x10] sm:$0xf]
    %v99 = vld [vmem:[%s93 + $0x14] sm:$0xf]
    %v100 = vld [vmem:[%s93 + $0x18] sm:$0xf]
    %v101 = vld [vmem:[%s93 + $0x1c] sm:$0xf]
    %v102 = vld [vmem:[%s93 + $0x20] sm:$0xf]
    %v103 = vld [vmem:[%s93 + $0x24] sm:$0xf]
    %v104 = vld [vmem:[%s93 + $0x28] sm:$0xf]
    %v105 = vld [vmem:[%s93 + $0x2c] sm:$0xf]
    %v106 = vld [vmem:[%s93 + $0x30] sm:$0xf]
    %v107 = vld [vmem:[%s93 + $0x34] sm:$0xf]
    %v108 = vld [vmem:[%s93 + $0x38] sm:$0xf]
    %v109 = vld [vmem:[%s93 + $0x3c] sm:$0xf]
    %s110 = scalar_lea.vmem [#allocation6], 1
    %v111 = vld [vmem:[%s110] sm:$0x1]
    %v113 = vperm.slane %v111, 0
    %v131 = vunpack.c.l.b16 %v94
    %v132 = vunpack.c.l.b16 %v95
    %v133 = vunpack.c.l.b16 %v96
    %v134 = vunpack.c.l.b16 %v97
    %v135 = vunpack.c.l.b16 %v98
    %v136 = vunpack.c.l.b16 %v99
    %v137 = vunpack.c.l.b16 %v100
    %v138 = vunpack.c.l.b16 %v101
    %v139 = vunpack.c.l.b16 %v102
    %v140 = vunpack.c.l.b16 %v103
    %v141 = vunpack.c.l.b16 %v104
    %v142 = vunpack.c.l.b16 %v105
    %v143 = vunpack.c.l.b16 %v106
    %v144 = vunpack.c.l.b16 %v107
    %v145 = vunpack.c.l.b16 %v108
    %v146 = vunpack.c.l.b16 %v109
    %v147 = vpack.c.b16 %v132, %v131
    %v148 = vpack.c.b16 %v134, %v133
    %v149 = vpack.c.b16 %v136, %v135
    %v150 = vpack.c.b16 %v138, %v137
    %v151 = vpack.c.b16 %v140, %v139
    %v152 = vpack.c.b16 %v142, %v141
    %v153 = vpack.c.b16 %v144, %v143
    %v154 = vpack.c.b16 %v146, %v145
    %163 = vmatpush.bf16.msra.mxu0 %v154
    %164 = vmatpush.bf16.msra.mxu0 %v153
    %165 = vmatpush.bf16.msra.mxu0 %v152
    %166 = vmatpush.bf16.msra.mxu0 %v151
    %167 = vmatpush.bf16.msra.mxu0 %v150
    %168 = vmatpush.bf16.msra.mxu0 %v149
    %169 = vmatpush.bf16.msra.mxu0 %v148
    %170 = vmatpush.bf16.msra.mxu0 %v147
    %171 = vmatmul.bf16.gmra.mxu0 %v92
    %v172 = vpop.f32.mrf.mxu0
    %v173 = vadd.f32 %v113, %v172
    %v174 = vpop.f32.mrf.mxu0
    %175 = vdwg.mxu0
    %v176 = vmax.f32 %v173, 0.0
    %v177 = vpack.c.bf16 %v176, %v176
    %s178 = scalar_lea.vmem [#allocation4], 128
    %v179 = vld [vmem:[%s178] sm:$0xf]
    %v180 = vld [vmem:[%s178 + $0x4] sm:$0xf]
    %v181 = vld [vmem:[%s178 + $0x8] sm:$0xf]
    %v182 = vld [vmem:[%s178 + $0xc] sm:$0xf]
    %v183 = vld [vmem:[%s178 + $0x10] sm:$0xf]
    %v184 = vld [vmem:[%s178 + $0x14] sm:$0xf]
    %v185 = vld [vmem:[%s178 + $0x18] sm:$0xf]
    %v186 = vld [vmem:[%s178 + $0x1c] sm:$0xf]
    %v187 = vld [vmem:[%s178 + $0x20] sm:$0xf]
    %v188 = vld [vmem:[%s178 + $0x24] sm:$0xf]
    %v189 = vld [vmem:[%s178 + $0x28] sm:$0xf]
    %v190 = vld [vmem:[%s178 + $0x2c] sm:$0xf]
    %v191 = vld [vmem:[%s178 + $0x30] sm:$0xf]
    %v192 = vld [vmem:[%s178 + $0x34] sm:$0xf]
    %v193 = vld [vmem:[%s178 + $0x38] sm:$0xf]
    %v194 = vld [vmem:[%s178 + $0x3c] sm:$0xf]
    %s195 = scalar_lea.vmem [#allocation6], 2
    %v196 = vld [vmem:[%s195] sm:$0x1]
    %v198 = vperm.slane %v196, 0
    %v216 = vunpack.c.l.b16 %v179
    %v217 = vunpack.c.l.b16 %v180
    %v218 = vunpack.c.l.b16 %v181
    %v219 = vunpack.c.l.b16 %v182
    %v220 = vunpack.c.l.b16 %v183
    %v221 = vunpack.c.l.b16 %v184
    %v222 = vunpack.c.l.b16 %v185
    %v223 = vunpack.c.l.b16 %v186
    %v224 = vunpack.c.l.b16 %v187
    %v225 = vunpack.c.l.b16 %v188
    %v226 = vunpack.c.l.b16 %v189
    %v227 = vunpack.c.l.b16 %v190
    %v228 = vunpack.c.l.b16 %v191
    %v229 = vunpack.c.l.b16 %v192
    %v230 = vunpack.c.l.b16 %v193
    %v231 = vunpack.c.l.b16 %v194
    %v232 = vpack.c.b16 %v217, %v216
    %v233 = vpack.c.b16 %v219, %v218
    %v234 = vpack.c.b16 %v221, %v220
    %v235 = vpack.c.b16 %v223, %v222
    %v236 = vpack.c.b16 %v225, %v224
    %v237 = vpack.c.b16 %v227, %v226
    %v238 = vpack.c.b16 %v229, %v228
    %v239 = vpack.c.b16 %v231, %v230
    %248 = vmatpush.bf16.msra.mxu0 %v239
    %249 = vmatpush.bf16.msra.mxu0 %v238
    %250 = vmatpush.bf16.msra.mxu0 %v237
    %251 = vmatpush.bf16.msra.mxu0 %v236
    %252 = vmatpush.bf16.msra.mxu0 %v235
    %253 = vmatpush.bf16.msra.mxu0 %v234
    %254 = vmatpush.bf16.msra.mxu0 %v233
    %255 = vmatpush.bf16.msra.mxu0 %v232
    %256 = vmatmul.bf16.gmra.mxu0 %v177
    %v257 = vpop.f32.mrf.mxu0
    %v258 = vadd.f32 %v198, %v257
    %v259 = vpop.f32.mrf.mxu0
    %260 = vdwg.mxu0
    %v261 = vpack.c.bf16 %v258, %v258
    %262 = vst [vmem:[%s3] sm:$0xf] %v261
    // Predicated region
    $region26: #{mlp_forward.1} parent=1 // pred_check
      _
    $region27: #{mlp_forward.1} parent=1 // pred_check_branch
      %264 = sbr.rel (0) target = $region29
    $region28: #{mlp_forward.1} parent=1 // pred_region
      _
    $region29: #{mlp_forward.1} parent=1 // pred_fallthru
      _
    // Predicated region
    $region30: #{mlp_forward.1} parent=1 // pred_check
      _
    $region31: #{mlp_forward.1} parent=1 // pred_check_branch
      %266 = sbr.rel (0) target = $region33
    $region32: #{mlp_forward.1} parent=1 // pred_region
      _
    $region33: #{mlp_forward.1} parent=1 // pred_fallthru
      _
    %267 = vsyncpa [#allocation3], 1
    %268 = vsyncpa [#allocation5], 1

</llo_original>
